<compile_context>
chip_gen: v5e
topology: v5e:2x2
jax: 0.10.0
libtpu: 0.0.40
codegen_flags: <defaults>
</compile_context>

<pallas_src>
import functools

import jax
import jax.numpy as jnp
from jax.experimental import pallas as pl
from jax.experimental.pallas import tpu as pltpu


# ------------------------------ kernels ------------------------------------ #

def _interaction_kernel_folded(x_ref, wA_ref, wB_ref, out_ref, *,
                               c_in, hid, hid_dtype):
    """x_ref holds [seg ; rec] stacked on channels: (C+Cr, TP)."""
    x = x_ref[...].astype(jnp.float32)                      # (C+Cr, TP)
    wA = wA_ref[...]                                        # (Hid, C+Cr+1)
    # fused 1x1 conv (conv1 + BN folded in); K = C+Cr, still inside the 8-pad.
    h = jnp.dot(wA[:, :c_in], x, preferred_element_type=jnp.float32)
    h = h.astype(hid_dtype)                                 # bf16 on v6e/v7x
    bias = wA[:, c_in:c_in + 1].astype(hid_dtype)           # (Hid, 1)
    h = jnp.maximum(h + bias, 0.0)
    wB = wB_ref[...]                                        # (C, Hid+1)
    out = jnp.dot(wB[:, :hid].astype(hid_dtype), h,
                  preferred_element_type=jnp.float32)
    out = out + wB[:, hid:hid + 1]
    out_ref[...] = out.astype(out_ref.dtype)


def _interaction_kernel_split(seg_ref, rec_ref, wA_ref, wB_ref, out_ref, *,
                              c_seg, c_rec, hid, hid_dtype):
    """Separate seg / rec inputs; recon path on the VPU (v5e / HBM-bound)."""
    seg = seg_ref[...].astype(jnp.float32)                  # (C,  TP)
    rec = rec_ref[...].astype(jnp.float32)                  # (Cr, TP)
    wA = wA_ref[...]                                        # (Hid, C+Cr+1)
    h = jnp.dot(wA[:, :c_seg], seg, preferred_element_type=jnp.float32)
    w12 = wA[:, c_seg:c_seg + c_rec]                        # (Hid, Cr)
    if c_rec == 1:
        # (Hid,1)*(1,TP) broadcast on the VPU instead of a K=1 MXU push.
        h = h + w12 * rec
    else:
        h = h + jnp.dot(w12, rec, preferred_element_type=jnp.float32)
    h = h.astype(hid_dtype)
    bias = wA[:, c_seg + c_rec:c_seg + c_rec + 1].astype(hid_dtype)
    h = jnp.maximum(h + bias, 0.0)
    wB = wB_ref[...]                                        # (C, Hid+1)
    out = jnp.dot(wB[:, :hid].astype(hid_dtype), h,
                  preferred_element_type=jnp.float32)
    out = out + wB[:, hid:hid + 1]
    out_ref[...] = out.astype(out_ref.dtype)


# --------------------------- param preparation ------------------------------ #

def fold_params(params):
    """Fold conv1(+bias) and eval-mode BN into conv2; pack into two arrays."""
    w1, b1, w2, gamma, beta, running_mean, running_var, eps, w3, b3 = params
    scale = gamma / jnp.sqrt(running_var + eps)          # (Hid,)
    shift = beta - running_mean * scale                  # (Hid,)
    w2s = w2 * scale[:, None]                            # (Hid, C)
    w12 = w2s @ w1                                       # (Hid, Cr)
    bias2 = w2s @ b1[:, None] + shift[:, None]           # (Hid, 1)
    wA = jnp.concatenate([w2s, w12, bias2], axis=1)      # (Hid, C+Cr+1)
    wB = jnp.concatenate([w3, b3[:, None]], axis=1)      # (C, Hid+1)
    return wA, wB


def _default_chip_flags():
    """(fold_recon, bf16_hidden) defaults by TPU generation."""
    try:
        kind = jax.devices()[0].device_kind.lower()
    except Exception:  # pragma: no cover - be permissive
        kind = ""
    old_gen = any(tag in kind for tag in ("v2", "v3", "v4", "v5"))
    # v5e and older: HBM-bound and no bf16 VPU -> keep split path, f32 hidden.
    return (not old_gen), (not old_gen)


# ------------------------------- wrapper ------------------------------------ #

def interaction_branch_pallas(seg_output, recon_output, params, *,
                              tile_p=32768, fold_recon=None, bf16_hidden=None):
    """seg_output: [B, C, H, W]; recon_output: [B, Cr, H, W] (NCHW, like PyTorch)."""
    B, C, H, W = seg_output.shape
    _, Cr, _, _ = recon_output.shape
    HW = H * W

    auto_fold, auto_bf16 = _default_chip_flags()
    if fold_recon is None:
        fold_recon = auto_fold
    if bf16_hidden is None:
        bf16_hidden = auto_bf16
    hid_dtype = jnp.bfloat16 if bf16_hidden else jnp.float32

    wA, wB = fold_params(params)
    Hid = wA.shape[0]

    # --- pixel tiling: validate/round to a lane multiple, clip to H*W -------
    tile_p = max(128, (int(tile_p) // 128) * 128)   # enforce %128 (was assumed)
    tp = HW if HW <= tile_p else tile_p
    npb = pl.cdiv(HW, tp)
    # Megacore load balance: prefer >= 4 grid steps when spatial extent allows.
    if B * npb < 4 and HW >= 256:
        tp2 = max(128, ((pl.cdiv(HW, 2) + 127) // 128) * 128)
        if tp2 < HW:
            tp = tp2
            npb = pl.cdiv(HW, tp)
    grid = (B, npb)

    # NCHW -> (B, C, H*W): pure reshape, no HBM transpose pass.
    seg3 = seg_output.reshape(B, C, HW)
    rec3 = recon_output.reshape(B, Cr, HW)

    def pix_spec(ch):
        # batch dim squeezed out of the kernel view -> kernel sees (ch, tp)
        return pl.BlockSpec((None, ch, tp), lambda b, p: (b, 0, p))

    def w_spec(arr):
        # tiny packed weights: one full block, resident across all grid steps
        return pl.BlockSpec(arr.shape, lambda b, p: (0, 0))

    if fold_recon:
        # recon rides the first MXU matmul; one cheap channel concat in XLA.
        x3 = jnp.concatenate([seg3, rec3], axis=1)           # (B, C+Cr, HW)
        kernel = functools.partial(_interaction_kernel_folded,
                                   c_in=C + Cr, hid=Hid, hid_dtype=hid_dtype)
        inputs = (x3, wA, wB)
        in_specs = [pix_spec(C + Cr), w_spec(wA), w_spec(wB)]
    else:
        kernel = functools.partial(_interaction_kernel_split,
                                   c_seg=C, c_rec=Cr, hid=Hid,
                                   hid_dtype=hid_dtype)
        inputs = (seg3, rec3, wA, wB)
        in_specs = [pix_spec(C), pix_spec(Cr), w_spec(wA), w_spec(wB)]

    # Explicit VMEM budget: double-buffered pixel slabs + hidden intermediate,
    # with headroom; capped at 48 MiB (<= v7x 64 MiB physical).
    itemsize = jnp.dtype(seg_output.dtype).itemsize
    pix_bufs = 2 * ((C + Cr) + C) * tp * itemsize
    hid_buf = 2 * Hid * tp * 4
    vmem_limit = int(min(48 << 20, max(32 << 20, pix_bufs + hid_buf)))

    out3 = pl.pallas_call(
        kernel,
        out_shape=jax.ShapeDtypeStruct((B, C, HW), seg_output.dtype),
        grid_spec=pltpu.PrefetchScalarGridSpec(
            num_scalar_prefetch=0,
            grid=grid,
            in_specs=in_specs,
            out_specs=pix_spec(C),
        ),
        compiler_params=pltpu.CompilerParams(
            dimension_semantics=("parallel", "parallel"),
            vmem_limit_bytes=vmem_limit),
    )(*inputs)

    return out3.reshape(B, C, H, W)


# --------------------------- reference & test -------------------------------- #

def init_params(key, seg_channels=4, recon_channels=1, hidden=32):
    """Deterministic synthetic parameters in the PyTorch module's native layout."""
    ks = jax.random.split(key, 8)
    # Conv2d(recon_channels, seg_channels, 1): weight [C, Cr, 1, 1] -> (C, Cr), bias (C,)
    w1 = jax.random.normal(ks[0], (seg_channels, recon_channels), jnp.float32) * 0.5
    b1 = jax.random.normal(ks[1], (seg_channels,), jnp.float32) * 0.1
    # Conv2d(seg_channels, 32, 1, bias=False): weight [32, C, 1, 1] -> (32, C)
    w2 = jax.random.normal(ks[2], (hidden, seg_channels), jnp.float32) * 0.3
    # BatchNorm2d(32) eval-mode stats + affine
    gamma = 1.0 + 0.1 * jax.random.normal(ks[3], (hidden,), jnp.float32)
    beta = 0.1 * jax.random.normal(ks[4], (hidden,), jnp.float32)
    running_mean = 0.1 * jax.random.normal(ks[5], (hidden,), jnp.float32)
    running_var = jnp.abs(1.0 + 0.1 * jax.random.normal(ks[6], (hidden,), jnp.float32))
    eps = 1e-5
    # Conv2d(32, seg_channels, 1): weight [C, 32, 1, 1] -> (C, 32), bias (C,)
    w3 = jax.random.normal(ks[7], (seg_channels, hidden), jnp.float32) * 0.2
    b3 = 0.05 * jnp.arange(seg_channels, dtype=jnp.float32)
    return (w1, b1, w2, gamma, beta, running_mean, running_var, eps, w3, b3)


def reference_forward(seg_output, recon_output, params):
    """Pure-JAX reference mirroring the PyTorch forward (eval-mode BN, unfolded)."""
    w1, b1, w2, gamma, beta, running_mean, running_var, eps, w3, b3 = params
    adj = jnp.einsum('oc,bchw->bohw', w1, recon_output) + b1[None, :, None, None]
    fused = seg_output + adj
    h = jnp.einsum('oc,bchw->bohw', w2, fused)
    scale = gamma / jnp.sqrt(running_var + eps)
    shift = beta - running_mean * scale
    h = jnp.maximum(h * scale[None, :, None, None] + shift[None, :, None, None], 0.0)
    return jnp.einsum('oc,bchw->bohw', w3, h) + b3[None, :, None, None]


if __name__ == "__main__":
    key = jax.random.PRNGKey(0)
    k_seg, k_rec, k_param = jax.random.split(key, 3)

    B, C, H, W = 2, 4, 16, 16
    seg = jax.random.normal(k_seg, (B, C, H, W), jnp.float32)
    rec = jax.random.normal(k_rec, (B, 1, H, W), jnp.float32)
    params = init_params(k_param, seg_channels=C, recon_channels=1, hidden=32)

    out = interaction_branch_pallas(seg, rec, params)
    out = jax.block_until_ready(out)

    ref = jax.block_until_ready(reference_forward(seg, rec, params))
    assert out.shape == (B, C, H, W)

    # Tolerance depends on whether the chip-adaptive bf16 intermediate is active.
    _, bf16_active = _default_chip_flags()
    atol = 5e-2 if bf16_active else 1e-4
    rtol = 5e-2 if bf16_active else 1e-4
    assert jnp.allclose(out, ref, atol=atol, rtol=rtol), \
        "Pallas output mismatch vs reference"

    print("KERNEL_OK")
</pallas_src>

<mosaic_0001>
module attributes {stable_mosaic.version = 11 : i64} {
  func.func @_interaction_kernel_folded(%arg0: i32, %arg1: i32, %arg2: memref<1x5x128xf32, #tpu.memory_space<vmem>>, %arg3: memref<32x6xf32, #tpu.memory_space<vmem>>, %arg4: memref<4x33xf32, #tpu.memory_space<vmem>>, %arg5: memref<1x4x128xf32, #tpu.memory_space<vmem>>) attributes {dimension_semantics = [#tpu.dimension_semantics<parallel>, #tpu.dimension_semantics<parallel>], iteration_bounds = array<i64: 2, 2>, scalar_prefetch = 0 : i64, scratch_operands = 0 : i64, tpu.core_type = #tpu.core_type<tc>, window_params = [{transform_indices = @transform_0, window_bounds = array<i64: 1, 5, 128>}, {pipeline_mode = #tpu.pipeline_mode<synchronous>, transform_indices = @transform_1, window_bounds = array<i64: 32, 6>}, {pipeline_mode = #tpu.pipeline_mode<synchronous>, transform_indices = @transform_2, window_bounds = array<i64: 4, 33>}, {transform_indices = @transform_3, window_bounds = array<i64: 1, 4, 128>}]} {
    %c0 = arith.constant 0 : index
    %c0_0 = arith.constant 0 : index
    %c0_1 = arith.constant 0 : index
    %0 = vector.load %arg2[%c0, %c0_0, %c0_1] : memref<1x5x128xf32, #tpu.memory_space<vmem>>, vector<1x5x128xf32>
    %1 = vector.shape_cast %0 : vector<1x5x128xf32> to vector<5x128xf32>
    %c0_2 = arith.constant 0 : index
    %c0_3 = arith.constant 0 : index
    %2 = vector.load %arg3[%c0_2, %c0_3] : memref<32x6xf32, #tpu.memory_space<vmem>>, vector<32x6xf32>
    %3 = vector.extract_strided_slice %2 {offsets = [0, 0], sizes = [32, 5], strides = [1, 1]} : vector<32x6xf32> to vector<32x5xf32>
    %cst = arith.constant dense<0.000000e+00> : vector<32x128xf32>
    %4 = tpu.matmul %3, %1, %cst {dimension_numbers = #tpu.dot_dimension_numbers<[1], [0], [0], [1], [0, 0, 1, 1], [], []>} : vector<32x5xf32>, vector<5x128xf32>, vector<32x128xf32> -> vector<32x128xf32>
    %5 = arith.truncf %4 : vector<32x128xf32> to vector<32x128xbf16>
    %6 = vector.extract_strided_slice %2 {offsets = [0, 5], sizes = [32, 1], strides = [1, 1]} : vector<32x6xf32> to vector<32x1xf32>
    %7 = arith.truncf %6 : vector<32x1xf32> to vector<32x1xbf16>
    %8 = vector.broadcast %7 : vector<32x1xbf16> to vector<32x128xbf16>
    %9 = arith.addf %5, %8 : vector<32x128xbf16>
    %cst_4 = arith.constant 0.000000e+00 : bf16
    %10 = vector.broadcast %cst_4 : bf16 to vector<32x128xbf16>
    %11 = arith.maximumf %9, %10 : vector<32x128xbf16>
    %c0_5 = arith.constant 0 : index
    %c0_6 = arith.constant 0 : index
    %12 = vector.load %arg4[%c0_5, %c0_6] : memref<4x33xf32, #tpu.memory_space<vmem>>, vector<4x33xf32>
    %13 = vector.extract_strided_slice %12 {offsets = [0, 0], sizes = [4, 32], strides = [1, 1]} : vector<4x33xf32> to vector<4x32xf32>
    %14 = arith.truncf %13 : vector<4x32xf32> to vector<4x32xbf16>
    %cst_7 = arith.constant dense<0.000000e+00> : vector<4x128xf32>
    %15 = tpu.matmul %14, %11, %cst_7 {dimension_numbers = #tpu.dot_dimension_numbers<[1], [0], [0], [1], [0, 0, 1, 1], [], []>} : vector<4x32xbf16>, vector<32x128xbf16>, vector<4x128xf32> -> vector<4x128xf32>
    %16 = vector.extract_strided_slice %12 {offsets = [0, 32], sizes = [4, 1], strides = [1, 1]} : vector<4x33xf32> to vector<4x1xf32>
    %17 = vector.broadcast %16 : vector<4x1xf32> to vector<4x128xf32>
    %18 = arith.addf %15, %17 : vector<4x128xf32>
    %c0_8 = arith.constant 0 : index
    %c0_9 = arith.constant 0 : index
    %c0_10 = arith.constant 0 : index
    %19 = vector.load %arg5[%c0_8, %c0_9, %c0_10] : memref<1x4x128xf32, #tpu.memory_space<vmem>>, vector<1x4x128xf32>
    %20 = vector.shape_cast %19 : vector<1x4x128xf32> to vector<4x128xf32>
    %21 = vector.shape_cast %18 : vector<4x128xf32> to vector<1x4x128xf32>
    tpu.vector_store %arg5[%c0_8, %c0_9, %c0_10], %21 {strides = array<i32>} : memref<1x4x128xf32, #tpu.memory_space<vmem>>, vector<1x4x128xf32>,
    return
  }
  func.func @transform_0(%arg0: i32, %arg1: i32) -> (i32, i32, i32) {
    %c0_i32 = arith.constant 0 : i32
    %c0_i32_0 = arith.constant 0 : i32
    return %arg0, %c0_i32, %arg1 : i32, i32, i32
  }
  func.func @transform_1(%arg0: i32, %arg1: i32) -> (i32, i32) {
    %c0_i32 = arith.constant 0 : i32
    %c0_i32_0 = arith.constant 0 : i32
    %c0_i32_1 = arith.constant 0 : i32
    return %c0_i32, %c0_i32_0 : i32, i32
  }
  func.func @transform_2(%arg0: i32, %arg1: i32) -> (i32, i32) {
    %c0_i32 = arith.constant 0 : i32
    %c0_i32_0 = arith.constant 0 : i32
    %c0_i32_1 = arith.constant 0 : i32
    return %c0_i32, %c0_i32_0 : i32, i32
  }
  func.func @transform_3(%arg0: i32, %arg1: i32) -> (i32, i32, i32) {
    %c0_i32 = arith.constant 0 : i32
    %c0_i32_0 = arith.constant 0 : i32
    return %arg0, %c0_i32, %arg1 : i32, i32, i32
  }
}

</mosaic_0001>

<llo_original>
// kernel: tpu_custom_call.1
$region0: #{tpu_custom_call.1}
  #allocation0 [shape = 'u32[]', space=smem, size = 0x4, offset = 0x4, fixed_abs, tag = 'smem constant byte address 0x4 - core index']
  #allocation1 [shape = 'u32[72,128]{1,0:T(1,128)}', space=vmem, size = 0x9000, scoped, tag = 'internal scratch']
  %s0 = inlined_call_operand.vmem [shape: f32[2,5,256], index: 0, kind: input, shape index: {}]
  %s1 = inlined_call_operand.vmem [shape: f32[32,6], index: 1, kind: input, shape index: {}]
  %s2 = inlined_call_operand.vmem [shape: f32[4,33], index: 2, kind: input, shape index: {}]
  %s3 = inlined_call_operand.hbm [shape: f32[2,4,256], index: 3, kind: output, shape index: {}]
  %s4 = sld [smem:[#allocation0]]
  $region45: #{tpu_custom_call.1} parent=0
    _
  %s6 = ssub.s32 1, %s4
  %s7 = scalar_select 0, %s6, %s4
  $region1: #{tpu_custom_call.1} parent=0
    #allocation2 [shape = 'u8[4096]{0}', space=vmem, size = 0x1000, scoped, tag = 'output window, operand 0']
    #allocation3 [shape = 's32[2]{0}', space=sflag, size = 0x8, scoped, tag = 'scoped memory for tpu_custom_call.1']
    %8 = vsyncpa [#allocation3], 0
    %s9 = scalar_lea.sflag [#allocation3], 1
    %10 = vsyncpa %s9, 0
    loop: start=0, step=1, limit=6
    $region2: #{tpu_custom_call.1} parent=1 // loop_pre_header
      _
    $region3: #{tpu_custom_call.1} parent=1 // loop_header
      %s12 = sphi 0, %s16
      %p13 = scmp.ge.s32.totalorder %s12, 6
      %s19 = sphi 0, %s31
      %s20 = sphi 0, %s27
      %s21 = sphi 0, %s19
      %s22 = sphi 0, %s20
      %s23 = sphi 0, %s21
      %s24 = sphi 0, %s22
      %s36 = sphi 0, %s38
      %s39 = sphi 0, %s36
      %s40 = sphi 0, %s39
      %s56 = sphi 0, %s40
      %s60 = sphi 0, %s60
      %s62 = sphi 0, %s60
      %s63 = sphi 0, %s62
      %s77 = sphi 0, %s63
      %s81 = sphi 0, %s81
      %s83 = sphi 0, %s81
      %s84 = sphi 0, %s83
      %s98 = sphi 0, %s84
      %s106 = sphi 0, %s108
      %s109 = sphi 0, %s106
      %s110 = sphi 0, %s109
      %s126 = sphi 0, %s110
    $region4: #{tpu_custom_call.1} parent=1 // loop_header_branch
      %15 = sbr.rel (%p13) target = $region8
    $region5: #{tpu_custom_call.1} parent=1 // loop_body
      %s17 = ssub.s32 %s12, 1
      %s18 = ssub.s32 %s12, 2
      %s25 = sadd.s32 1, %s20
      %p26 = scmp.ge.s32.totalorder %s25, 2
      %s27 = scalar_select %p26, 0, %s25
      %s28 = sadd.s32 1, %s19
      %s29 = scalar_select %p26, %s28, %s19
      %p30 = scmp.ge.s32.totalorder %s29, 2
      %s31 = scalar_select %p30, 0, %s29
      %s32 = ssub.s32 %s19, %s31
      %s33 = ssub.s32 %s20, %s27
      %s34 = sor.u32 %s32, %s33
      %p35 = scmp.eq.s32.totalorder %s34, 0
      %s37 = sadd.s32 %s36, 1
      %s38 = scalar_select %p35, %s36, %s37
      %p41 = pneg %p35
      %p42 = scmp.eq.s32.totalorder %s12, 3
      %p43 = por %p41, %p42
      %p44 = scmp.ne.s32.totalorder %s36, %s39
      %p45 = scmp.eq.s32.totalorder %s12, 0
      %p46 = por %p44, %p45
      %p47 = scmp.ne.s32.totalorder %s36, %s39
      %p48 = scmp.eq.s32.totalorder %s17, 3
      %p49 = por %p47, %p48
      %p50 = scmp.ne.s32.totalorder %s39, %s40
      %p51 = scmp.eq.s32.totalorder %s17, 0
      %p52 = por %p50, %p51
      %p53 = scmp.ne.s32.totalorder %s39, %s40
      %p54 = scmp.eq.s32.totalorder %s18, 3
      %p55 = por %p53, %p54
      %p57 = scmp.ne.s32.totalorder %s40, %s56
      %p58 = scmp.eq.s32.totalorder %s18, 0
      %p59 = por %p57, %p58
      %s61 = sadd.s32 %s60, 1
      %p64 = scmp.eq.s32.totalorder %s12, 3
      %p65 = scmp.ne.s32.totalorder %s60, %s62
      %p66 = scmp.eq.s32.totalorder %s12, 0
      %p67 = por %p65, %p66
      %p68 = scmp.ne.s32.totalorder %s60, %s62
      %p69 = scmp.eq.s32.totalorder %s17, 3
      %p70 = por %p68, %p69
      %p71 = scmp.ne.s32.totalorder %s62, %s63
      %p72 = scmp.eq.s32.totalorder %s17, 0
      %p73 = por %p71, %p72
      %p74 = scmp.ne.s32.totalorder %s62, %s63
      %p75 = scmp.eq.s32.totalorder %s18, 3
      %p76 = por %p74, %p75
      %p78 = scmp.ne.s32.totalorder %s63, %s77
      %p79 = scmp.eq.s32.totalorder %s18, 0
      %p80 = por %p78, %p79
      %s82 = sadd.s32 %s81, 1
      %p85 = scmp.eq.s32.totalorder %s12, 3
      %p86 = scmp.ne.s32.totalorder %s81, %s83
      %p87 = scmp.eq.s32.totalorder %s12, 0
      %p88 = por %p86, %p87
      %p89 = scmp.ne.s32.totalorder %s81, %s83
      %p90 = scmp.eq.s32.totalorder %s17, 3
      %p91 = por %p89, %p90
      %p92 = scmp.ne.s32.totalorder %s83, %s84
      %p93 = scmp.eq.s32.totalorder %s17, 0
      %p94 = por %p92, %p93
      %p95 = scmp.ne.s32.totalorder %s83, %s84
      %p96 = scmp.eq.s32.totalorder %s18, 3
      %p97 = por %p95, %p96
      %p99 = scmp.ne.s32.totalorder %s84, %s98
      %p100 = scmp.eq.s32.totalorder %s18, 0
      %p101 = por %p99, %p100
      %s102 = ssub.s32 %s19, %s31
      %s103 = ssub.s32 %s20, %s27
      %s104 = sor.u32 %s102, %s103
      %p105 = scmp.eq.s32.totalorder %s104, 0
      %s107 = sadd.s32 %s106, 1
      %s108 = scalar_select %p105, %s106, %s107
      %p111 = pneg %p105
      %p112 = scmp.eq.s32.totalorder %s12, 3
      %p113 = por %p111, %p112
      %p114 = scmp.ne.s32.totalorder %s106, %s109
      %p115 = scmp.eq.s32.totalorder %s12, 0
      %p116 = por %p114, %p115
      %p117 = scmp.ne.s32.totalorder %s106, %s109
      %p118 = scmp.eq.s32.totalorder %s17, 3
      %p119 = por %p117, %p118
      %p120 = scmp.ne.s32.totalorder %s109, %s110
      %p121 = scmp.eq.s32.totalorder %s17, 0
      %p122 = por %p120, %p121
      %p123 = scmp.ne.s32.totalorder %s109, %s110
      %p124 = scmp.eq.s32.totalorder %s18, 3
      %p125 = por %p123, %p124
      %p127 = scmp.ne.s32.totalorder %s110, %s126
      %p128 = scmp.eq.s32.totalorder %s18, 0
      %p129 = por %p127, %p128
      %p130 = scmp.le.s32.totalorder 1, %s12
      %p131 = scmp.lt.s32.totalorder %s12, 5
      %p132 = pnand %p130, %p131
      %p133 = pneg %p132
      // Predicated region
      $region9: #{tpu_custom_call.1} parent=5 // pred_check
        _
      $region10: #{tpu_custom_call.1} parent=5 // pred_check_branch
        %135 = sbr.rel (%p132) target = $region12
      $region11: #{tpu_custom_call.1} parent=5 // pred_region
        %s136 = ssub.s32 %s12, 1
        // Predicated region
        $region13: #{tpu_custom_call.1} parent=11 // pred_check
          %p137 = pneg %p73
        $region14: #{tpu_custom_call.1} parent=11 // pred_check_branch
          %139 = sbr.rel (%p137) target = $region16
        $region15: #{tpu_custom_call.1} parent=11 // pred_region
          _
        $region16: #{tpu_custom_call.1} parent=11 // pred_fallthru
          _
        // Predicated region
        $region17: #{tpu_custom_call.1} parent=11 // pred_check
          %p140 = pneg %p94
        $region18: #{tpu_custom_call.1} parent=11 // pred_check_branch
          %142 = sbr.rel (%p140) target = $region20
        $region19: #{tpu_custom_call.1} parent=11 // pred_region
          _
        $region20: #{tpu_custom_call.1} parent=11 // pred_fallthru
          _
      $region12: #{tpu_custom_call.1} parent=5 // pred_fallthru
        _
      %p143 = scmp.lt.s32.totalorder %s12, 4
      // Predicated region
      $region21: #{tpu_custom_call.1} parent=5 // pred_check
        %p144 = pneg %p143
      $region22: #{tpu_custom_call.1} parent=5 // pred_check_branch
        %146 = sbr.rel (%p144) target = $region24
      $region23: #{tpu_custom_call.1} parent=5 // pred_region
        // Predicated region
        $region25: #{tpu_custom_call.1} parent=23 // pred_check
          %p147 = pneg %p46
        $region26: #{tpu_custom_call.1} parent=23 // pred_check_branch
          %149 = sbr.rel (%p147) target = $region28
        $region27: #{tpu_custom_call.1} parent=23 // pred_region
          %p150 = scmp.lt.s32.totalorder %s19, 1
          %s151 = scalar_select %p150, %s19, 1
          %p152 = scmp.lt.s32.totalorder %s20, 1
          %s153 = scalar_select %p152, %s20, 1
          %s154 = smul.addr %s151, 2
          %s155 = sadd.s32 %s153, %s154
          %s156 = smul.addr %s155, 8
          %s157 = scalar_lea.vmem %s0, %s156
        $region28: #{tpu_custom_call.1} parent=23 // pred_fallthru
          _
      $region24: #{tpu_custom_call.1} parent=5 // pred_fallthru
        _
      %p158 = scmp.le.s32.totalorder 1, %s12
      %p159 = scmp.lt.s32.totalorder %s12, 5
      %p160 = pnand %p158, %p159
      %p161 = pneg %p160
      // Predicated region
      $region29: #{tpu_custom_call.1} parent=5 // pred_check
        _
      $region30: #{tpu_custom_call.1} parent=5 // pred_check_branch
        %163 = sbr.rel (%p160) target = $region32
      $region31: #{tpu_custom_call.1} parent=5 // pred_region
        %s164 = ssub.s32 %s12, 1
        %p165 = scmp.lt.s32.totalorder %s21, 1
        %s166 = scalar_select %p165, %s21, 1
        %p167 = scmp.lt.s32.totalorder %s22, 1
        %s168 = scalar_select %p167, %s22, 1
        %s169 = smul.addr %s166, 2
        %s170 = sadd.s32 %s168, %s169
        %s171 = smul.addr %s170, 8
        %s172 = scalar_lea.vmem %s0, %s171
        %p173 = pneg %p52
        %p174 = pneg %p49
        %p175 = pneg %p73
        %p176 = pneg %p70
        %p177 = pneg %p94
        %p178 = pneg %p91
        %p179 = pneg %p122
        %p180 = pneg %p119
        %s181 = sand.u32 %s109, 1
        %s182 = scalar_lea.sflag [#allocation3], %s181
        %s183 = sand.u32 %s109, 1
        %s184 = smul.addr %s183, 4
        %s185 = scalar_lea.vmem [#allocation2], %s184
        %p186 = scmp.lt.s32.totalorder %s21, 1
        %s187 = scalar_select %p186, %s21, 1
        %p188 = scmp.lt.s32.totalorder %s22, 1
        %s189 = scalar_select %p188, %s22, 1
        %s190 = smul.addr %s187, 2
        %s191 = sadd.s32 %s189, %s190
        %s192 = smul.addr %s191, 8
        %s193 = scalar_lea.vmem %s0, %s192
        %v195 = vld [vmem:[%s193] sm:$0x1f]
        %v196 = vld [vmem:[%s1] sm:$0xff]
        %v197 = vld [vmem:[%s1 + $0x8] sm:$0xff]
        %v198 = vld [vmem:[%s1 + $0x10] sm:$0xff]
        %v199 = vld [vmem:[%s1 + $0x18] sm:$0xff]
        %vm200 = vcmask 39936
        %v202 = vsel %vm200, %v196, 0
        %v205 = vsel %vm200, %v197, 0
        %v208 = vsel %vm200, %v198, 0
        %v211 = vsel %vm200, %v199, 0
        %vm213 = vcmask 1044480
        %v215 = vsel %vm213, %v195, 0
        %217 = vmatpush.msra.mxu0 0.0
        %218 = vmatpush.msra.mxu0 0.0
        %219 = vmatpush.msra.mxu0 0.0
        %220 = vmatpush.msra.mxu0 0.0
        %221 = vmatpush.msra.mxu0 0.0
        %222 = vmatpush.msra.mxu0 0.0
        %223 = vmatpush.msra.mxu0 0.0
        %224 = vmatpush.msra.mxu0 0.0
        %225 = vmatpush.msra.mxu0 0.0
        %226 = vmatpush.msra.mxu0 0.0
        %227 = vmatpush.msra.mxu0 0.0
        %228 = vmatpush.msra.mxu0 0.0
        %229 = vmatpush.msra.mxu0 0.0
        %230 = vmatpush.msra.mxu0 0.0
        %231 = vmatpush.msra.mxu0 0.0
        %232 = vmatpush.msra.mxu0 %v215
        %233 = vmatmul.f32.gmra.mxu0 %v202
        %v234 = vpop.f32.mrf.mxu0
        %v235 = vadd.f32 0.0, %v234
        %236 = vmatmul.f32.gmra.mxu0 %v205
        %v237 = vpop.f32.mrf.mxu0
        %v238 = vadd.f32 0.0, %v237
        %239 = vmatmul.f32.gmra.mxu0 %v208
        %v240 = vpop.f32.mrf.mxu0
        %v241 = vadd.f32 0.0, %v240
        %242 = vmatmul.f32.gmra.mxu0 %v211
        %v243 = vpop.f32.mrf.mxu0
        %v244 = vadd.f32 0.0, %v243
        %245 = vdwg.mxu0
        %v246 = vpack.c.bf16 %v235, %v235
        %v247 = vpack.c.bf16 %v238, %v238
        %v248 = vpack.c.bf16 %v241, %v241
        %v249 = vpack.c.bf16 %v244, %v244
        %v250 = vpack.c.bf16 %v196, %v196
        %v251 = vpack.c.bf16 %v197, %v197
        %v252 = vpack.c.bf16 %v198, %v198
        %v253 = vpack.c.bf16 %v199, %v199
        %255 = vset.pattern.permute.xlu0 5
        %256 = vperm.xlu0 %255, %v250
        %v257 = vpop.permute.xlu0 %256
        %v260 = vunpack.c.l.s4 839922192
        %v261 = vunpack.c.0.s8 %v260
        %v262 = vperm.slane %v257, %v261
        %264 = vset.pattern.permute.xlu0 5
        %265 = vperm.xlu0 %264, %v251
        %v266 = vpop.permute.xlu0 %265
        %v269 = vunpack.c.l.s4 839922192
        %v270 = vunpack.c.0.s8 %v269
        %v271 = vperm.slane %v266, %v270
        %273 = vset.pattern.permute.xlu0 5
        %274 = vperm.xlu0 %273, %v252
        %v275 = vpop.permute.xlu0 %274
        %v278 = vunpack.c.l.s4 839922192
        %v279 = vunpack.c.0.s8 %v278
        %v280 = vperm.slane %v275, %v279
        %282 = vset.pattern.permute.xlu0 5
        %283 = vperm.xlu0 %282, %v253
        %v284 = vpop.permute.xlu0 %283
        %v287 = vunpack.c.l.s4 839922192
        %v288 = vunpack.c.0.s8 %v287
        %v289 = vperm.slane %v284, %v288
        %v290 = vunpack.c.l.bf16 %v246
        %v291 = vunpack.c.l.bf16 %v247
        %v292 = vunpack.c.l.bf16 %v248
        %v293 = vunpack.c.l.bf16 %v249
        %v294 = vunpack.c.l.bf16 %v262
        %v295 = vunpack.c.l.bf16 %v271
        %v296 = vunpack.c.l.bf16 %v280
        %v297 = vunpack.c.l.bf16 %v289
        %v298 = vadd.f32 %v290, %v294
        %v299 = vadd.f32 %v291, %v295
        %v300 = vadd.f32 %v292, %v296
        %v301 = vadd.f32 %v293, %v297
        %v302 = vpack.c.bf16 %v298, %v298
        %v303 = vpack.c.bf16 %v299, %v299
        %v304 = vpack.c.bf16 %v300, %v300
        %v305 = vpack.c.bf16 %v301, %v301
        %v306 = vunpack.c.l.bf16 %v302
        %v307 = vunpack.c.l.bf16 %v303
        %v308 = vunpack.c.l.bf16 %v304
        %v309 = vunpack.c.l.bf16 %v305
        %v310 = vmax.f32 %v306, 0.0
        %v311 = vmax.f32 %v307, 0.0
        %v312 = vmax.f32 %v308, 0.0
        %v313 = vmax.f32 %v309, 0.0
        %v314 = vpack.c.bf16 %v311, %v310
        %v315 = vpack.c.bf16 %v313, %v312
        %v316 = vld [vmem:[%s2] sm:$0xf]
        %v317 = vpack.c.bf16 %v316, %v316
        %319 = vset.pattern.permute.xlu0 32
        %320 = vperm.xlu0 %319, %v316
        %v321 = vpop.permute.xlu0 %320
        %vm323 = vcmask 261120
        %v325 = vsel %vm323, %v317, 0
        %327 = vmatpush.bf16.msra.mxu0 0
        %328 = vmatpush.bf16.msra.mxu0 0
        %329 = vmatpush.bf16.msra.mxu0 0
        %330 = vmatpush.bf16.msra.mxu0 0
        %331 = vmatpush.bf16.msra.mxu0 0
        %332 = vmatpush.bf16.msra.mxu0 0
        %333 = vmatpush.bf16.msra.mxu0 %v315
        %334 = vmatpush.bf16.msra.mxu0 %v314
        %335 = vmatmul.bf16.gmra.mxu0 %v325
        %v336 = vpop.f32.mrf.mxu0
        %v337 = vadd.f32 %v321, %v336
        %v338 = vpop.f32.mrf.mxu0
        %339 = vdwg.mxu0
        %340 = vst [vmem:[%s185] sm:$0xf] %v337
        %s341 = sand.u32 %s109, 1
        %s342 = scalar_lea.sflag [#allocation3], %s341
        %s343 = sand.u32 %s109, 1
        %s344 = smul.addr %s343, 4
        %s345 = scalar_lea.vmem [#allocation2], %s344
        // Predicated region
        $region33: #{tpu_custom_call.1} parent=31 // pred_check
          %p346 = pneg %p119
        $region34: #{tpu_custom_call.1} parent=31 // pred_check_branch
          %348 = sbr.rel (%p346) target = $region36
        $region35: #{tpu_custom_call.1} parent=31 // pred_region
          %350 = vsyncadd %s342, 0
          %s351 = smul.addr %s21, 2
          %s352 = sadd.s32 %s22, %s351
          %s353 = smul.addr %s352, 4
          %s354 = scalar_lea.hbm %s3, %s353
          %s356 = sshll.u32 %s345, 4
          %s357 = int_to_ptr.vmem [resolvable:$true] %s356
          %s358 = sshll.u32 %s354, 4
          %s359 = int_to_ptr.hbm [resolvable:$true] %s358
          %361 = dma.vmem_to_hbm [thread:$0]  %s357, 64, %s359, %s342
        $region36: #{tpu_custom_call.1} parent=31 // pred_fallthru
          _
      $region32: #{tpu_custom_call.1} parent=5 // pred_fallthru
        _
      %p362 = scmp.le.s32.totalorder 2, %s12
      // Predicated region
      $region37: #{tpu_custom_call.1} parent=5 // pred_check
        %p363 = pneg %p362
      $region38: #{tpu_custom_call.1} parent=5 // pred_check_branch
        %365 = sbr.rel (%p363) target = $region40
      $region39: #{tpu_custom_call.1} parent=5 // pred_region
        %s366 = ssub.s32 %s12, 2
        // Predicated region
        $region41: #{tpu_custom_call.1} parent=39 // pred_check
          %p367 = pneg %p125
        $region42: #{tpu_custom_call.1} parent=39 // pred_check_branch
          %369 = sbr.rel (%p367) target = $region44
        $region43: #{tpu_custom_call.1} parent=39 // pred_region
          %s370 = sand.u32 %s110, 1
          %s371 = scalar_lea.sflag [#allocation3], %s370
          %s372 = sand.u32 %s110, 1
          %s373 = smul.addr %s372, 4
          %s374 = scalar_lea.vmem [#allocation2], %s373
          %376 = dma.done %s371, 64
        $region44: #{tpu_custom_call.1} parent=39 // pred_fallthru
          _
      $region40: #{tpu_custom_call.1} parent=5 // pred_fallthru
        _
    $region6: #{tpu_custom_call.1} parent=1 // loop_footer
      %s16 = sadd.s32 1, %s12
    $region7: #{tpu_custom_call.1} parent=1 // loop_footer_branch
      %11 = sbr.rel target = $region3
    $region8: #{tpu_custom_call.1} parent=1 // loop_exit
      _
    %377 = vsyncpa [#allocation3], 1
    %s378 = scalar_lea.sflag [#allocation3], 1
    %379 = vsyncpa %s378, 1

</llo_original>
